<compile_context>
chip_gen: v6e
topology: v6e:2x2x1
jax: 0.10.0
libtpu: 0.0.40
codegen_flags: <defaults>
</compile_context>

<pallas_src>
import jax
import jax.numpy as jnp
from jax import lax
from jax.experimental import pallas as pl
from jax.experimental.pallas import tpu as pltpu

EMBEDDING_DIM = 50
E_PAD = 128          # embedding dim zero-padded for (8,128)/MXU alignment
HIDDEN_DIM = 32
OUTPUTS = 4
OUT_PAD = 128        # lane-dense output slab; wrapper slices to OUTPUTS
VOCAB = 100
SEQ_LEN = 8


def dqn_kernel(embeds_ref, wih_ref, whh_ref, b_ref, wf_ref, bf_ref, out_ref):
    """LSTM recurrence (statically unrolled) + folded nn1*nn2*head matmul."""
    H = HIDDEN_DIM

    # Input contribution to all gates for every timestep in one matmul.
    # PyTorch LSTM gate order along the 4H axis: i, f, g, o.
    gx = jnp.dot(embeds_ref[...], wih_ref[...],
                 preferred_element_type=jnp.float32) + b_ref[...]   # (S, 4H)
    whh = whh_ref[...]                                              # (H, 4H)

    h = jnp.zeros((1, H), jnp.float32)
    c = jnp.zeros((1, H), jnp.float32)

    # SEQ_LEN is a compile-time constant -> full static unroll, static slicing.
    for t in range(SEQ_LEN):
        g = gx[t:t + 1, :] + jnp.dot(h, whh,
                                     preferred_element_type=jnp.float32)  # (1, 4H)
        sg = jax.nn.sigmoid(g)          # one EUP pass over the whole vreg
        tg = jnp.tanh(g)                # one EUP pass over the whole vreg
        i_g = sg[:, 0:H]
        f_g = sg[:, H:2 * H]
        g_g = tg[:, 2 * H:3 * H]
        o_g = sg[:, 3 * H:4 * H]
        c = f_g * c + i_g * g_g
        h = o_g * jnp.tanh(c)

    # Folded nn1 -> nn2 -> head: single matmul + bias, lane-dense (1, 128) out.
    out = jnp.dot(h, wf_ref[...], preferred_element_type=jnp.float32) + bf_ref[...]
    out_ref[...] = out.astype(out_ref.dtype)


def dqn_forward(sentence_idx, kparams):
    """Full DQN.forward: embedding lookup (glue) + Pallas kernel."""
    embeds = jnp.take(kparams["embedding_pad"], sentence_idx, axis=0)  # (S, E_PAD)

    vmem = pl.BlockSpec(memory_space=pltpu.MemorySpace.VMEM)
    kernel = pl.pallas_call(
        dqn_kernel,
        out_shape=jax.ShapeDtypeStruct((1, OUT_PAD), jnp.float32),
        in_specs=[vmem] * 6,
        out_specs=vmem,
    )
    out_pad = kernel(
        embeds,
        kparams["w_ih_t_pad"], kparams["w_hh_t"], kparams["b_lstm"],
        kparams["w_fold"], kparams["b_fold"],
    )
    return out_pad[:, :OUTPUTS]


def init_params(key):
    """PyTorch-layout parameters (weight (out,in), bias (out,))."""
    ks = jax.random.split(key, 10)
    s = 0.1

    def rnd(k, shape):
        return (s * jax.random.normal(k, shape)).astype(jnp.float32)

    return {
        "embedding": rnd(ks[0], (VOCAB, EMBEDDING_DIM)),
        "w_ih": rnd(ks[1], (4 * HIDDEN_DIM, EMBEDDING_DIM)),
        "w_hh": rnd(ks[2], (4 * HIDDEN_DIM, HIDDEN_DIM)),
        "b_ih": rnd(ks[3], (4 * HIDDEN_DIM,)),
        "b_hh": rnd(ks[4], (4 * HIDDEN_DIM,)),
        "w1": rnd(ks[5], (HIDDEN_DIM, HIDDEN_DIM)),
        "b1": rnd(ks[6], (HIDDEN_DIM,)),
        "w2": rnd(ks[7], (HIDDEN_DIM, HIDDEN_DIM)),
        "b2": rnd(ks[8], (HIDDEN_DIM,)),
        "wh": rnd(ks[9], (OUTPUTS, HIDDEN_DIM)),
        "bh": jnp.zeros((OUTPUTS,), jnp.float32),
    }


def prepare_kernel_params(p):
    """Pre-transpose, zero-pad, and fold weights for the Pallas kernel."""
    # Zero-pad embedding / weight_ih along the E axis: 50 -> 128 (math unchanged).
    emb_pad = jnp.zeros((VOCAB, E_PAD), jnp.float32).at[:, :EMBEDDING_DIM].set(
        p["embedding"])
    w_ih_t = p["w_ih"].T                                     # (E, 4H)
    w_ih_t_pad = jnp.zeros((E_PAD, 4 * HIDDEN_DIM), jnp.float32).at[
        :EMBEDDING_DIM, :].set(w_ih_t)

    # Fold nn1 -> nn2 -> head (no activations between them):
    #   y = ((h @ W1t + b1) @ W2t + b2) @ Wht + bh
    #     = h @ (W1t @ W2t @ Wht) + ((b1 @ W2t + b2) @ Wht + bh)
    w1_t, w2_t, wh_t = p["w1"].T, p["w2"].T, p["wh"].T       # (H,H),(H,H),(H,O)
    w_fold = w1_t @ w2_t @ wh_t                              # (H, O)
    b_fold = (p["b1"] @ w2_t + p["b2"]) @ wh_t + p["bh"]     # (O,)

    # Lane-dense padding of the folded head: (H, 128) / (1, 128).
    w_fold_pad = jnp.zeros((HIDDEN_DIM, OUT_PAD), jnp.float32).at[
        :, :OUTPUTS].set(w_fold)
    b_fold_pad = jnp.zeros((1, OUT_PAD), jnp.float32).at[0, :OUTPUTS].set(b_fold)

    return {
        "embedding_pad": emb_pad,
        "w_ih_t_pad": w_ih_t_pad,
        "w_hh_t": p["w_hh"].T,                               # (H, 4H)
        "b_lstm": (p["b_ih"] + p["b_hh"]).reshape(1, -1),    # (1, 4H)
        "w_fold": w_fold_pad,
        "b_fold": b_fold_pad,
    }


def dqn_reference(sentence_idx, p):
    """Pure-JAX reference of the PyTorch forward (unfused, unpadded)."""
    H = HIDDEN_DIM
    embeds = jnp.take(p["embedding"], sentence_idx, axis=0)        # (S, E)
    gx = embeds @ p["w_ih"].T + (p["b_ih"] + p["b_hh"])[None, :]   # (S, 4H)

    def step(carry, g_row):
        h, c = carry
        g = g_row[None, :] + h @ p["w_hh"].T
        i = jax.nn.sigmoid(g[:, 0:H])
        f = jax.nn.sigmoid(g[:, H:2 * H])
        gg = jnp.tanh(g[:, 2 * H:3 * H])
        o = jax.nn.sigmoid(g[:, 3 * H:4 * H])
        c = f * c + i * gg
        h = o * jnp.tanh(c)
        return (h, c), None

    h0 = jnp.zeros((1, H), jnp.float32)
    c0 = jnp.zeros((1, H), jnp.float32)
    (h_n, _), _ = lax.scan(step, (h0, c0), gx)
    x = h_n @ p["w1"].T + p["b1"]
    x = x @ p["w2"].T + p["b2"]
    return x @ p["wh"].T + p["bh"]


if __name__ == "__main__":
    key = jax.random.PRNGKey(0)
    k_param, k_idx = jax.random.split(key)
    params = init_params(k_param)
    kparams = prepare_kernel_params(params)
    sentence_idx = jax.random.randint(k_idx, (SEQ_LEN,), 0, VOCAB, dtype=jnp.int32)

    out = dqn_forward(sentence_idx, kparams)
    out = jax.block_until_ready(out)

    ref = dqn_reference(sentence_idx, params)
    assert out.shape == (1, OUTPUTS), out.shape
    assert jnp.allclose(out, ref, atol=1e-5, rtol=1e-5), (out, ref)

    print("KERNEL_OK")
</pallas_src>

<mosaic_0001>
module attributes {stable_mosaic.version = 11 : i64} {
  func.func @dqn_kernel(%arg0: memref<8x128xf32, #tpu.memory_space<vmem>>, %arg1: memref<128x128xf32, #tpu.memory_space<vmem>>, %arg2: memref<32x128xf32, #tpu.memory_space<vmem>>, %arg3: memref<1x128xf32, #tpu.memory_space<vmem>>, %arg4: memref<32x128xf32, #tpu.memory_space<vmem>>, %arg5: memref<1x128xf32, #tpu.memory_space<vmem>>, %arg6: memref<1x128xf32, #tpu.memory_space<vmem>>) attributes {dimension_semantics = [], scalar_prefetch = 0 : i64, scratch_operands = 0 : i64, tpu.core_type = #tpu.core_type<tc>} {
    %c0 = arith.constant 0 : index
    %c0_0 = arith.constant 0 : index
    %0 = vector.load %arg0[%c0, %c0_0] : memref<8x128xf32, #tpu.memory_space<vmem>>, vector<8x128xf32>
    %c0_1 = arith.constant 0 : index
    %c0_2 = arith.constant 0 : index
    %1 = vector.load %arg1[%c0_1, %c0_2] : memref<128x128xf32, #tpu.memory_space<vmem>>, vector<128x128xf32>
    %cst = arith.constant dense<0.000000e+00> : vector<8x128xf32>
    %2 = tpu.matmul %0, %1, %cst {dimension_numbers = #tpu.dot_dimension_numbers<[1], [0], [0], [1], [0, 0, 1, 1], [], []>} : vector<8x128xf32>, vector<128x128xf32>, vector<8x128xf32> -> vector<8x128xf32>
    %c0_3 = arith.constant 0 : index
    %c0_4 = arith.constant 0 : index
    %3 = vector.load %arg3[%c0_3, %c0_4] : memref<1x128xf32, #tpu.memory_space<vmem>>, vector<1x128xf32>
    %4 = vector.broadcast %3 : vector<1x128xf32> to vector<8x128xf32>
    %5 = arith.addf %2, %4 : vector<8x128xf32>
    %c0_5 = arith.constant 0 : index
    %c0_6 = arith.constant 0 : index
    %6 = vector.load %arg2[%c0_5, %c0_6] : memref<32x128xf32, #tpu.memory_space<vmem>>, vector<32x128xf32>
    %cst_7 = arith.constant 0.000000e+00 : f32
    %7 = vector.broadcast %cst_7 : f32 to vector<1x32xf32>
    %cst_8 = arith.constant 0.000000e+00 : f32
    %8 = vector.broadcast %cst_8 : f32 to vector<1x32xf32>
    %9 = vector.extract_strided_slice %5 {offsets = [0, 0], sizes = [1, 128], strides = [1, 1]} : vector<8x128xf32> to vector<1x128xf32>
    %cst_9 = arith.constant dense<0.000000e+00> : vector<1x128xf32>
    %10 = tpu.matmul %7, %6, %cst_9 {dimension_numbers = #tpu.dot_dimension_numbers<[1], [0], [0], [1], [0, 0, 1, 1], [], []>} : vector<1x32xf32>, vector<32x128xf32>, vector<1x128xf32> -> vector<1x128xf32>
    %11 = arith.addf %9, %10 : vector<1x128xf32>
    %12 = arith.negf %11 : vector<1x128xf32>
    %13 = math.exp %12 : vector<1x128xf32>
    %cst_10 = arith.constant 1.000000e+00 : f32
    %14 = vector.broadcast %cst_10 : f32 to vector<1x128xf32>
    %15 = arith.addf %14, %13 : vector<1x128xf32>
    %16 = arith.divf %14, %15 : vector<1x128xf32>
    %17 = math.tanh %11 : vector<1x128xf32>
    %18 = vector.extract_strided_slice %16 {offsets = [0, 0], sizes = [1, 32], strides = [1, 1]} : vector<1x128xf32> to vector<1x32xf32>
    %19 = vector.extract_strided_slice %16 {offsets = [0, 32], sizes = [1, 32], strides = [1, 1]} : vector<1x128xf32> to vector<1x32xf32>
    %20 = vector.extract_strided_slice %17 {offsets = [0, 64], sizes = [1, 32], strides = [1, 1]} : vector<1x128xf32> to vector<1x32xf32>
    %21 = vector.extract_strided_slice %16 {offsets = [0, 96], sizes = [1, 32], strides = [1, 1]} : vector<1x128xf32> to vector<1x32xf32>
    %22 = arith.mulf %19, %8 : vector<1x32xf32>
    %23 = arith.mulf %18, %20 : vector<1x32xf32>
    %24 = arith.addf %22, %23 : vector<1x32xf32>
    %25 = math.tanh %24 : vector<1x32xf32>
    %26 = arith.mulf %21, %25 : vector<1x32xf32>
    %27 = vector.extract_strided_slice %5 {offsets = [1, 0], sizes = [1, 128], strides = [1, 1]} : vector<8x128xf32> to vector<1x128xf32>
    %cst_11 = arith.constant dense<0.000000e+00> : vector<1x128xf32>
    %28 = tpu.matmul %26, %6, %cst_11 {dimension_numbers = #tpu.dot_dimension_numbers<[1], [0], [0], [1], [0, 0, 1, 1], [], []>} : vector<1x32xf32>, vector<32x128xf32>, vector<1x128xf32> -> vector<1x128xf32>
    %29 = arith.addf %27, %28 : vector<1x128xf32>
    %30 = arith.negf %29 : vector<1x128xf32>
    %31 = math.exp %30 : vector<1x128xf32>
    %cst_12 = arith.constant 1.000000e+00 : f32
    %32 = vector.broadcast %cst_12 : f32 to vector<1x128xf32>
    %33 = arith.addf %32, %31 : vector<1x128xf32>
    %34 = arith.divf %32, %33 : vector<1x128xf32>
    %35 = math.tanh %29 : vector<1x128xf32>
    %36 = vector.extract_strided_slice %34 {offsets = [0, 0], sizes = [1, 32], strides = [1, 1]} : vector<1x128xf32> to vector<1x32xf32>
    %37 = vector.extract_strided_slice %34 {offsets = [0, 32], sizes = [1, 32], strides = [1, 1]} : vector<1x128xf32> to vector<1x32xf32>
    %38 = vector.extract_strided_slice %35 {offsets = [0, 64], sizes = [1, 32], strides = [1, 1]} : vector<1x128xf32> to vector<1x32xf32>
    %39 = vector.extract_strided_slice %34 {offsets = [0, 96], sizes = [1, 32], strides = [1, 1]} : vector<1x128xf32> to vector<1x32xf32>
    %40 = arith.mulf %37, %24 : vector<1x32xf32>
    %41 = arith.mulf %36, %38 : vector<1x32xf32>
    %42 = arith.addf %40, %41 : vector<1x32xf32>
    %43 = math.tanh %42 : vector<1x32xf32>
    %44 = arith.mulf %39, %43 : vector<1x32xf32>
    %45 = vector.extract_strided_slice %5 {offsets = [2, 0], sizes = [1, 128], strides = [1, 1]} : vector<8x128xf32> to vector<1x128xf32>
    %cst_13 = arith.constant dense<0.000000e+00> : vector<1x128xf32>
    %46 = tpu.matmul %44, %6, %cst_13 {dimension_numbers = #tpu.dot_dimension_numbers<[1], [0], [0], [1], [0, 0, 1, 1], [], []>} : vector<1x32xf32>, vector<32x128xf32>, vector<1x128xf32> -> vector<1x128xf32>
    %47 = arith.addf %45, %46 : vector<1x128xf32>
    %48 = arith.negf %47 : vector<1x128xf32>
    %49 = math.exp %48 : vector<1x128xf32>
    %cst_14 = arith.constant 1.000000e+00 : f32
    %50 = vector.broadcast %cst_14 : f32 to vector<1x128xf32>
    %51 = arith.addf %50, %49 : vector<1x128xf32>
    %52 = arith.divf %50, %51 : vector<1x128xf32>
    %53 = math.tanh %47 : vector<1x128xf32>
    %54 = vector.extract_strided_slice %52 {offsets = [0, 0], sizes = [1, 32], strides = [1, 1]} : vector<1x128xf32> to vector<1x32xf32>
    %55 = vector.extract_strided_slice %52 {offsets = [0, 32], sizes = [1, 32], strides = [1, 1]} : vector<1x128xf32> to vector<1x32xf32>
    %56 = vector.extract_strided_slice %53 {offsets = [0, 64], sizes = [1, 32], strides = [1, 1]} : vector<1x128xf32> to vector<1x32xf32>
    %57 = vector.extract_strided_slice %52 {offsets = [0, 96], sizes = [1, 32], strides = [1, 1]} : vector<1x128xf32> to vector<1x32xf32>
    %58 = arith.mulf %55, %42 : vector<1x32xf32>
    %59 = arith.mulf %54, %56 : vector<1x32xf32>
    %60 = arith.addf %58, %59 : vector<1x32xf32>
    %61 = math.tanh %60 : vector<1x32xf32>
    %62 = arith.mulf %57, %61 : vector<1x32xf32>
    %63 = vector.extract_strided_slice %5 {offsets = [3, 0], sizes = [1, 128], strides = [1, 1]} : vector<8x128xf32> to vector<1x128xf32>
    %cst_15 = arith.constant dense<0.000000e+00> : vector<1x128xf32>
    %64 = tpu.matmul %62, %6, %cst_15 {dimension_numbers = #tpu.dot_dimension_numbers<[1], [0], [0], [1], [0, 0, 1, 1], [], []>} : vector<1x32xf32>, vector<32x128xf32>, vector<1x128xf32> -> vector<1x128xf32>
    %65 = arith.addf %63, %64 : vector<1x128xf32>
    %66 = arith.negf %65 : vector<1x128xf32>
    %67 = math.exp %66 : vector<1x128xf32>
    %cst_16 = arith.constant 1.000000e+00 : f32
    %68 = vector.broadcast %cst_16 : f32 to vector<1x128xf32>
    %69 = arith.addf %68, %67 : vector<1x128xf32>
    %70 = arith.divf %68, %69 : vector<1x128xf32>
    %71 = math.tanh %65 : vector<1x128xf32>
    %72 = vector.extract_strided_slice %70 {offsets = [0, 0], sizes = [1, 32], strides = [1, 1]} : vector<1x128xf32> to vector<1x32xf32>
    %73 = vector.extract_strided_slice %70 {offsets = [0, 32], sizes = [1, 32], strides = [1, 1]} : vector<1x128xf32> to vector<1x32xf32>
    %74 = vector.extract_strided_slice %71 {offsets = [0, 64], sizes = [1, 32], strides = [1, 1]} : vector<1x128xf32> to vector<1x32xf32>
    %75 = vector.extract_strided_slice %70 {offsets = [0, 96], sizes = [1, 32], strides = [1, 1]} : vector<1x128xf32> to vector<1x32xf32>
    %76 = arith.mulf %73, %60 : vector<1x32xf32>
    %77 = arith.mulf %72, %74 : vector<1x32xf32>
    %78 = arith.addf %76, %77 : vector<1x32xf32>
    %79 = math.tanh %78 : vector<1x32xf32>
    %80 = arith.mulf %75, %79 : vector<1x32xf32>
    %81 = vector.extract_strided_slice %5 {offsets = [4, 0], sizes = [1, 128], strides = [1, 1]} : vector<8x128xf32> to vector<1x128xf32>
    %cst_17 = arith.constant dense<0.000000e+00> : vector<1x128xf32>
    %82 = tpu.matmul %80, %6, %cst_17 {dimension_numbers = #tpu.dot_dimension_numbers<[1], [0], [0], [1], [0, 0, 1, 1], [], []>} : vector<1x32xf32>, vector<32x128xf32>, vector<1x128xf32> -> vector<1x128xf32>
    %83 = arith.addf %81, %82 : vector<1x128xf32>
    %84 = arith.negf %83 : vector<1x128xf32>
    %85 = math.exp %84 : vector<1x128xf32>
    %cst_18 = arith.constant 1.000000e+00 : f32
    %86 = vector.broadcast %cst_18 : f32 to vector<1x128xf32>
    %87 = arith.addf %86, %85 : vector<1x128xf32>
    %88 = arith.divf %86, %87 : vector<1x128xf32>
    %89 = math.tanh %83 : vector<1x128xf32>
    %90 = vector.extract_strided_slice %88 {offsets = [0, 0], sizes = [1, 32], strides = [1, 1]} : vector<1x128xf32> to vector<1x32xf32>
    %91 = vector.extract_strided_slice %88 {offsets = [0, 32], sizes = [1, 32], strides = [1, 1]} : vector<1x128xf32> to vector<1x32xf32>
    %92 = vector.extract_strided_slice %89 {offsets = [0, 64], sizes = [1, 32], strides = [1, 1]} : vector<1x128xf32> to vector<1x32xf32>
    %93 = vector.extract_strided_slice %88 {offsets = [0, 96], sizes = [1, 32], strides = [1, 1]} : vector<1x128xf32> to vector<1x32xf32>
    %94 = arith.mulf %91, %78 : vector<1x32xf32>
    %95 = arith.mulf %90, %92 : vector<1x32xf32>
    %96 = arith.addf %94, %95 : vector<1x32xf32>
    %97 = math.tanh %96 : vector<1x32xf32>
    %98 = arith.mulf %93, %97 : vector<1x32xf32>
    %99 = vector.extract_strided_slice %5 {offsets = [5, 0], sizes = [1, 128], strides = [1, 1]} : vector<8x128xf32> to vector<1x128xf32>
    %cst_19 = arith.constant dense<0.000000e+00> : vector<1x128xf32>
    %100 = tpu.matmul %98, %6, %cst_19 {dimension_numbers = #tpu.dot_dimension_numbers<[1], [0], [0], [1], [0, 0, 1, 1], [], []>} : vector<1x32xf32>, vector<32x128xf32>, vector<1x128xf32> -> vector<1x128xf32>
    %101 = arith.addf %99, %100 : vector<1x128xf32>
    %102 = arith.negf %101 : vector<1x128xf32>
    %103 = math.exp %102 : vector<1x128xf32>
    %cst_20 = arith.constant 1.000000e+00 : f32
    %104 = vector.broadcast %cst_20 : f32 to vector<1x128xf32>
    %105 = arith.addf %104, %103 : vector<1x128xf32>
    %106 = arith.divf %104, %105 : vector<1x128xf32>
    %107 = math.tanh %101 : vector<1x128xf32>
    %108 = vector.extract_strided_slice %106 {offsets = [0, 0], sizes = [1, 32], strides = [1, 1]} : vector<1x128xf32> to vector<1x32xf32>
    %109 = vector.extract_strided_slice %106 {offsets = [0, 32], sizes = [1, 32], strides = [1, 1]} : vector<1x128xf32> to vector<1x32xf32>
    %110 = vector.extract_strided_slice %107 {offsets = [0, 64], sizes = [1, 32], strides = [1, 1]} : vector<1x128xf32> to vector<1x32xf32>
    %111 = vector.extract_strided_slice %106 {offsets = [0, 96], sizes = [1, 32], strides = [1, 1]} : vector<1x128xf32> to vector<1x32xf32>
    %112 = arith.mulf %109, %96 : vector<1x32xf32>
    %113 = arith.mulf %108, %110 : vector<1x32xf32>
    %114 = arith.addf %112, %113 : vector<1x32xf32>
    %115 = math.tanh %114 : vector<1x32xf32>
    %116 = arith.mulf %111, %115 : vector<1x32xf32>
    %117 = vector.extract_strided_slice %5 {offsets = [6, 0], sizes = [1, 128], strides = [1, 1]} : vector<8x128xf32> to vector<1x128xf32>
    %cst_21 = arith.constant dense<0.000000e+00> : vector<1x128xf32>
    %118 = tpu.matmul %116, %6, %cst_21 {dimension_numbers = #tpu.dot_dimension_numbers<[1], [0], [0], [1], [0, 0, 1, 1], [], []>} : vector<1x32xf32>, vector<32x128xf32>, vector<1x128xf32> -> vector<1x128xf32>
    %119 = arith.addf %117, %118 : vector<1x128xf32>
    %120 = arith.negf %119 : vector<1x128xf32>
    %121 = math.exp %120 : vector<1x128xf32>
    %cst_22 = arith.constant 1.000000e+00 : f32
    %122 = vector.broadcast %cst_22 : f32 to vector<1x128xf32>
    %123 = arith.addf %122, %121 : vector<1x128xf32>
    %124 = arith.divf %122, %123 : vector<1x128xf32>
    %125 = math.tanh %119 : vector<1x128xf32>
    %126 = vector.extract_strided_slice %124 {offsets = [0, 0], sizes = [1, 32], strides = [1, 1]} : vector<1x128xf32> to vector<1x32xf32>
    %127 = vector.extract_strided_slice %124 {offsets = [0, 32], sizes = [1, 32], strides = [1, 1]} : vector<1x128xf32> to vector<1x32xf32>
    %128 = vector.extract_strided_slice %125 {offsets = [0, 64], sizes = [1, 32], strides = [1, 1]} : vector<1x128xf32> to vector<1x32xf32>
    %129 = vector.extract_strided_slice %124 {offsets = [0, 96], sizes = [1, 32], strides = [1, 1]} : vector<1x128xf32> to vector<1x32xf32>
    %130 = arith.mulf %127, %114 : vector<1x32xf32>
    %131 = arith.mulf %126, %128 : vector<1x32xf32>
    %132 = arith.addf %130, %131 : vector<1x32xf32>
    %133 = math.tanh %132 : vector<1x32xf32>
    %134 = arith.mulf %129, %133 : vector<1x32xf32>
    %135 = vector.extract_strided_slice %5 {offsets = [7, 0], sizes = [1, 128], strides = [1, 1]} : vector<8x128xf32> to vector<1x128xf32>
    %cst_23 = arith.constant dense<0.000000e+00> : vector<1x128xf32>
    %136 = tpu.matmul %134, %6, %cst_23 {dimension_numbers = #tpu.dot_dimension_numbers<[1], [0], [0], [1], [0, 0, 1, 1], [], []>} : vector<1x32xf32>, vector<32x128xf32>, vector<1x128xf32> -> vector<1x128xf32>
    %137 = arith.addf %135, %136 : vector<1x128xf32>
    %138 = arith.negf %137 : vector<1x128xf32>
    %139 = math.exp %138 : vector<1x128xf32>
    %cst_24 = arith.constant 1.000000e+00 : f32
    %140 = vector.broadcast %cst_24 : f32 to vector<1x128xf32>
    %141 = arith.addf %140, %139 : vector<1x128xf32>
    %142 = arith.divf %140, %141 : vector<1x128xf32>
    %143 = math.tanh %137 : vector<1x128xf32>
    %144 = vector.extract_strided_slice %142 {offsets = [0, 0], sizes = [1, 32], strides = [1, 1]} : vector<1x128xf32> to vector<1x32xf32>
    %145 = vector.extract_strided_slice %142 {offsets = [0, 32], sizes = [1, 32], strides = [1, 1]} : vector<1x128xf32> to vector<1x32xf32>
    %146 = vector.extract_strided_slice %143 {offsets = [0, 64], sizes = [1, 32], strides = [1, 1]} : vector<1x128xf32> to vector<1x32xf32>
    %147 = vector.extract_strided_slice %142 {offsets = [0, 96], sizes = [1, 32], strides = [1, 1]} : vector<1x128xf32> to vector<1x32xf32>
    %148 = arith.mulf %145, %132 : vector<1x32xf32>
    %149 = arith.mulf %144, %146 : vector<1x32xf32>
    %150 = arith.addf %148, %149 : vector<1x32xf32>
    %151 = math.tanh %150 : vector<1x32xf32>
    %152 = arith.mulf %147, %151 : vector<1x32xf32>
    %c0_25 = arith.constant 0 : index
    %c0_26 = arith.constant 0 : index
    %153 = vector.load %arg4[%c0_25, %c0_26] : memref<32x128xf32, #tpu.memory_space<vmem>>, vector<32x128xf32>
    %cst_27 = arith.constant dense<0.000000e+00> : vector<1x128xf32>
    %154 = tpu.matmul %152, %153, %cst_27 {dimension_numbers = #tpu.dot_dimension_numbers<[1], [0], [0], [1], [0, 0, 1, 1], [], []>} : vector<1x32xf32>, vector<32x128xf32>, vector<1x128xf32> -> vector<1x128xf32>
    %c0_28 = arith.constant 0 : index
    %c0_29 = arith.constant 0 : index
    %155 = vector.load %arg5[%c0_28, %c0_29] : memref<1x128xf32, #tpu.memory_space<vmem>>, vector<1x128xf32>
    %156 = arith.addf %154, %155 : vector<1x128xf32>
    %c0_30 = arith.constant 0 : index
    %c0_31 = arith.constant 0 : index
    %157 = vector.load %arg6[%c0_30, %c0_31] : memref<1x128xf32, #tpu.memory_space<vmem>>, vector<1x128xf32>
    tpu.vector_store %arg6[%c0_30, %c0_31], %156 {strides = array<i32>} : memref<1x128xf32, #tpu.memory_space<vmem>>, vector<1x128xf32>,
    return
  }
}

</mosaic_0001>

<llo_original>
// kernel: tpu_custom_call.1
$region0: #{tpu_custom_call.1}
  #allocation0 [shape = 'u32[]', space=smem, size = 0x4, offset = 0x4, fixed_abs, tag = 'smem constant byte address 0x4 - core index']
  #allocation1 [shape = 'u32[144,128]{1,0:T(1,128)}', space=vmem, size = 0x12000, scoped, tag = 'internal scratch']
  %s0 = inlined_call_operand.hbm [shape: f32[8,128], index: 0, kind: input, shape index: {}]
  %s1 = inlined_call_operand.hbm [shape: f32[128,128], index: 1, kind: input, shape index: {}]
  %s2 = inlined_call_operand.hbm [shape: f32[32,128], index: 2, kind: input, shape index: {}]
  %s3 = inlined_call_operand.vmem [shape: f32[1,128], index: 3, kind: input, shape index: {}]
  %s4 = inlined_call_operand.hbm [shape: f32[32,128], index: 4, kind: input, shape index: {}]
  %s5 = inlined_call_operand.vmem [shape: f32[1,128], index: 5, kind: input, shape index: {}]
  %s6 = inlined_call_operand.hbm [shape: f32[1,128], index: 6, kind: output, shape index: {}]
  %s7 = sld [smem:[#allocation0]]
  $region50: #{tpu_custom_call.1} parent=0
    _
  %s9 = ssub.s32 1, %s7
  %s10 = scalar_select 0, %s9, %s7
  $region1: #{tpu_custom_call.1} parent=0
    #allocation2 [shape = 'u8[4096]{0}', space=vmem, size = 0x1000, scoped, tag = 'input window, operand 0, single buffered']
    #allocation3 [shape = 's32[1]{0}', space=sflag, size = 0x4, scoped, tag = 'scoped memory for tpu_custom_call.1']
    #allocation4 [shape = 's32[1]{0}', space=sflag, size = 0x4, scoped, tag = 'scoped memory for tpu_custom_call.1']
    #allocation5 [shape = 'u8[65536]{0}', space=vmem, size = 0x10000, scoped, tag = 'input window, operand 1, single buffered']
    #allocation6 [shape = 's32[1]{0}', space=sflag, size = 0x4, scoped, tag = 'scoped memory for tpu_custom_call.1']
    #allocation7 [shape = 'u8[16384]{0}', space=vmem, size = 0x4000, scoped, tag = 'input window, operand 2, single buffered']
    #allocation8 [shape = 'u8[16384]{0}', space=vmem, size = 0x4000, scoped, tag = 'input window, operand 4, single buffered']
    #allocation9 [shape = 's32[1]{0}', space=sflag, size = 0x4, scoped, tag = 'scoped memory for tpu_custom_call.1']
    #allocation10 [shape = 'u8[512]{0}', space=vmem, size = 0x400, scoped, tag = 'output window, operand 0, single buffered']
    %11 = vsyncpa [#allocation3], 0
    %12 = vsyncpa [#allocation6], 0
    %13 = vsyncpa [#allocation9], 0
    %14 = vsyncpa [#allocation4], 0
    // Predicated region
    $region2: #{tpu_custom_call.1} parent=1 // pred_check
      _
    $region3: #{tpu_custom_call.1} parent=1 // pred_check_branch
      %16 = sbr.rel (0) target = $region5
    $region4: #{tpu_custom_call.1} parent=1 // pred_region
      %s18 = ssub.s32 128, 128
      %19 = vsyncadd [#allocation3], %s18
      %s21 = sshll.u32 [#allocation2], 4
      %s22 = int_to_ptr.vmem [resolvable:$true] %s21
      %24 = dma.hbm_to_vmem [thread:$0]  %s0, 128, %s22, [#allocation3]
    $region5: #{tpu_custom_call.1} parent=1 // pred_fallthru
      _
    // Predicated region
    $region6: #{tpu_custom_call.1} parent=1 // pred_check
      _
    $region7: #{tpu_custom_call.1} parent=1 // pred_check_branch
      %26 = sbr.rel (0) target = $region9
    $region8: #{tpu_custom_call.1} parent=1 // pred_region
      %s28 = ssub.s32 2048, 2048
      %29 = vsyncadd [#allocation6], %s28
      %s30 = sshll.u32 [#allocation5], 4
      %s31 = int_to_ptr.vmem [resolvable:$true] %s30
      %36 = dma.hbm_to_vmem [thread:$0]  %s1, 2048, %s31, [#allocation6], 128, 128, 8
    $region9: #{tpu_custom_call.1} parent=1 // pred_fallthru
      _
    // Predicated region
    $region10: #{tpu_custom_call.1} parent=1 // pred_check
      _
    $region11: #{tpu_custom_call.1} parent=1 // pred_check_branch
      %38 = sbr.rel (0) target = $region13
    $region12: #{tpu_custom_call.1} parent=1 // pred_region
      %s40 = ssub.s32 512, 512
      %41 = vsyncadd [#allocation6], %s40
      %s42 = sshll.u32 [#allocation7], 4
      %s43 = int_to_ptr.vmem [resolvable:$true] %s42
      %48 = dma.hbm_to_vmem [thread:$0]  %s2, 512, %s43, [#allocation6], 128, 128, 8
    $region13: #{tpu_custom_call.1} parent=1 // pred_fallthru
      _
    // Predicated region
    $region14: #{tpu_custom_call.1} parent=1 // pred_check
      _
    $region15: #{tpu_custom_call.1} parent=1 // pred_check_branch
      %50 = sbr.rel (0) target = $region17
    $region16: #{tpu_custom_call.1} parent=1 // pred_region
      _
    $region17: #{tpu_custom_call.1} parent=1 // pred_fallthru
      _
    // Predicated region
    $region18: #{tpu_custom_call.1} parent=1 // pred_check
      _
    $region19: #{tpu_custom_call.1} parent=1 // pred_check_branch
      %52 = sbr.rel (0) target = $region21
    $region20: #{tpu_custom_call.1} parent=1 // pred_region
      %s54 = ssub.s32 512, 512
      %55 = vsyncadd [#allocation9], %s54
      %s56 = sshll.u32 [#allocation8], 4
      %s57 = int_to_ptr.vmem [resolvable:$true] %s56
      %62 = dma.hbm_to_vmem [thread:$0]  %s4, 512, %s57, [#allocation9], 128, 128, 8
    $region21: #{tpu_custom_call.1} parent=1 // pred_fallthru
      _
    // Predicated region
    $region22: #{tpu_custom_call.1} parent=1 // pred_check
      _
    $region23: #{tpu_custom_call.1} parent=1 // pred_check_branch
      %64 = sbr.rel (0) target = $region25
    $region24: #{tpu_custom_call.1} parent=1 // pred_region
      _
    $region25: #{tpu_custom_call.1} parent=1 // pred_fallthru
      _
    // Predicated region
    $region26: #{tpu_custom_call.1} parent=1 // pred_check
      _
    $region27: #{tpu_custom_call.1} parent=1 // pred_check_branch
      %66 = sbr.rel (0) target = $region29
    $region28: #{tpu_custom_call.1} parent=1 // pred_region
      %67 = dma.done [#allocation3], 128
    $region29: #{tpu_custom_call.1} parent=1 // pred_fallthru
      _
    // Predicated region
    $region30: #{tpu_custom_call.1} parent=1 // pred_check
      _
    $region31: #{tpu_custom_call.1} parent=1 // pred_check_branch
      %69 = sbr.rel (0) target = $region33
    $region32: #{tpu_custom_call.1} parent=1 // pred_region
      %70 = dma.done [#allocation6], 2048
    $region33: #{tpu_custom_call.1} parent=1 // pred_fallthru
      _
    // Predicated region
    $region34: #{tpu_custom_call.1} parent=1 // pred_check
      _
    $region35: #{tpu_custom_call.1} parent=1 // pred_check_branch
      %72 = sbr.rel (0) target = $region37
    $region36: #{tpu_custom_call.1} parent=1 // pred_region
      %73 = dma.done [#allocation6], 512
    $region37: #{tpu_custom_call.1} parent=1 // pred_fallthru
      _
    // Predicated region
    $region38: #{tpu_custom_call.1} parent=1 // pred_check
      _
    $region39: #{tpu_custom_call.1} parent=1 // pred_check_branch
      %75 = sbr.rel (0) target = $region41
    $region40: #{tpu_custom_call.1} parent=1 // pred_region
      %76 = dma.done [#allocation9], 512
    $region41: #{tpu_custom_call.1} parent=1 // pred_fallthru
      _
    %v77 = vld [vmem:[#allocation2] sm:$0xff]
    %v78 = vld [vmem:[#allocation5] sm:$0xff]
    %v79 = vld [vmem:[#allocation5 + $0x8] sm:$0xff]
    %v80 = vld [vmem:[#allocation5 + $0x10] sm:$0xff]
    %v81 = vld [vmem:[#allocation5 + $0x18] sm:$0xff]
    %v82 = vld [vmem:[#allocation5 + $0x20] sm:$0xff]
    %v83 = vld [vmem:[#allocation5 + $0x28] sm:$0xff]
    %v84 = vld [vmem:[#allocation5 + $0x30] sm:$0xff]
    %v85 = vld [vmem:[#allocation5 + $0x38] sm:$0xff]
    %v86 = vld [vmem:[#allocation5 + $0x40] sm:$0xff]
    %v87 = vld [vmem:[#allocation5 + $0x48] sm:$0xff]
    %v88 = vld [vmem:[#allocation5 + $0x50] sm:$0xff]
    %v89 = vld [vmem:[#allocation5 + $0x58] sm:$0xff]
    %v90 = vld [vmem:[#allocation5 + $0x60] sm:$0xff]
    %v91 = vld [vmem:[#allocation5 + $0x68] sm:$0xff]
    %v92 = vld [vmem:[#allocation5 + $0x70] sm:$0xff]
    %v93 = vld [vmem:[#allocation5 + $0x78] sm:$0xff]
    %v94 = vld [vmem:[%s3] sm:$0x1]
    %v96 = vlaneseq
    %v97 = vshrl.u32 %v96, 7
    %v98 = vsub.s32 0, %v97
    %v99 = vrot.slane %v94, %v98
    %101 = vmatprep.subr.mxu0 0.0
    %102 = vmatpush1.msra.mxu0 %v93
    %103 = vmatprep.subr.mxu0 0.0
    %104 = vmatpush1.msra.mxu0 %v92
    %105 = vmatprep.subr.mxu0 0.0
    %106 = vmatpush1.msra.mxu0 %v91
    %107 = vmatprep.subr.mxu0 0.0
    %108 = vmatpush1.msra.mxu0 %v90
    %109 = vmatprep.subr.mxu0 0.0
    %110 = vmatpush1.msra.mxu0 %v89
    %111 = vmatprep.subr.mxu0 0.0
    %112 = vmatpush1.msra.mxu0 %v88
    %113 = vmatprep.subr.mxu0 0.0
    %114 = vmatpush1.msra.mxu0 %v87
    %115 = vmatprep.subr.mxu0 0.0
    %116 = vmatpush1.msra.mxu0 %v86
    %117 = vmatprep.subr.mxu0 0.0
    %118 = vmatpush1.msra.mxu0 %v85
    %119 = vmatprep.subr.mxu0 0.0
    %120 = vmatpush1.msra.mxu0 %v84
    %121 = vmatprep.subr.mxu0 0.0
    %122 = vmatpush1.msra.mxu0 %v83
    %123 = vmatprep.subr.mxu0 0.0
    %124 = vmatpush1.msra.mxu0 %v82
    %125 = vmatprep.subr.mxu0 0.0
    %126 = vmatpush1.msra.mxu0 %v81
    %127 = vmatprep.subr.mxu0 0.0
    %128 = vmatpush1.msra.mxu0 %v80
    %129 = vmatprep.subr.mxu0 0.0
    %130 = vmatpush1.msra.mxu0 %v79
    %131 = vmatprep.subr.mxu0 0.0
    %132 = vmatpush1.msra.mxu0 %v78
    %133 = vmatprep.subr.mxu0 0.0
    %134 = vmatpush2.msra.mxu0 0.0
    %135 = vmatprep.subr.mxu0 0.0
    %136 = vmatpush2.msra.mxu0 0.0
    %137 = vmatprep.subr.mxu0 0.0
    %138 = vmatpush2.msra.mxu0 0.0
    %139 = vmatprep.subr.mxu0 0.0
    %140 = vmatpush2.msra.mxu0 0.0
    %141 = vmatprep.subr.mxu0 0.0
    %142 = vmatpush2.msra.mxu0 0.0
    %143 = vmatprep.subr.mxu0 0.0
    %144 = vmatpush2.msra.mxu0 0.0
    %145 = vmatprep.subr.mxu0 0.0
    %146 = vmatpush2.msra.mxu0 0.0
    %147 = vmatprep.subr.mxu0 0.0
    %148 = vmatpush2.msra.mxu0 0.0
    %149 = vmatprep.subr.mxu0 0.0
    %150 = vmatpush2.msra.mxu0 0.0
    %151 = vmatprep.subr.mxu0 0.0
    %152 = vmatpush2.msra.mxu0 0.0
    %153 = vmatprep.subr.mxu0 0.0
    %154 = vmatpush2.msra.mxu0 0.0
    %155 = vmatprep.subr.mxu0 0.0
    %156 = vmatpush2.msra.mxu0 0.0
    %157 = vmatprep.subr.mxu0 0.0
    %158 = vmatpush2.msra.mxu0 0.0
    %159 = vmatprep.subr.mxu0 0.0
    %160 = vmatpush2.msra.mxu0 0.0
    %161 = vmatprep.subr.mxu0 0.0
    %162 = vmatpush2.msra.mxu0 0.0
    %163 = vmatprep.subr.mxu0 0.0
    %164 = vmatpush2.msra.mxu0 0.0
    %165 = vmatprep.mubr.f32.mxu0 0.0
    %166 = vmatmul.mubr.f32.gmra.mxu0 %v77
    %v167 = vpop.f32.mrf.mxu0
    %v168 = vadd.f32 %v99, %v167
    %v169 = vpop.f32.mrf.mxu0
    %170 = vdwg.mxu0
    %v171 = vld [vmem:[#allocation7] sm:$0xff]
    %v172 = vld [vmem:[#allocation7 + $0x8] sm:$0xff]
    %v173 = vld [vmem:[#allocation7 + $0x10] sm:$0xff]
    %v174 = vld [vmem:[#allocation7 + $0x18] sm:$0xff]
    %vm175 = vcmask 261120
    %v177 = vsel %vm175, 0.0, 0
    %179 = vmatprep.subr.mxu0 0.0
    %180 = vmatpush1.msra.mxu0 0.0
    %181 = vmatprep.subr.mxu0 0.0
    %182 = vmatpush1.msra.mxu0 0.0
    %183 = vmatprep.subr.mxu0 0.0
    %184 = vmatpush1.msra.mxu0 0.0
    %185 = vmatprep.subr.mxu0 0.0
    %186 = vmatpush1.msra.mxu0 0.0
    %187 = vmatprep.subr.mxu0 0.0
    %188 = vmatpush1.msra.mxu0 0.0
    %189 = vmatprep.subr.mxu0 0.0
    %190 = vmatpush1.msra.mxu0 0.0
    %191 = vmatprep.subr.mxu0 0.0
    %192 = vmatpush1.msra.mxu0 0.0
    %193 = vmatprep.subr.mxu0 0.0
    %194 = vmatpush1.msra.mxu0 0.0
    %195 = vmatprep.subr.mxu0 0.0
    %196 = vmatpush1.msra.mxu0 0.0
    %197 = vmatprep.subr.mxu0 0.0
    %198 = vmatpush1.msra.mxu0 0.0
    %199 = vmatprep.subr.mxu0 0.0
    %200 = vmatpush1.msra.mxu0 0.0
    %201 = vmatprep.subr.mxu0 0.0
    %202 = vmatpush1.msra.mxu0 0.0
    %203 = vmatprep.subr.mxu0 0.0
    %204 = vmatpush1.msra.mxu0 %v174
    %205 = vmatprep.subr.mxu0 0.0
    %206 = vmatpush1.msra.mxu0 %v173
    %207 = vmatprep.subr.mxu0 0.0
    %208 = vmatpush1.msra.mxu0 %v172
    %209 = vmatprep.subr.mxu0 0.0
    %210 = vmatpush1.msra.mxu0 %v171
    %211 = vmatprep.subr.mxu0 0.0
    %212 = vmatpush2.msra.mxu0 0.0
    %213 = vmatprep.subr.mxu0 0.0
    %214 = vmatpush2.msra.mxu0 0.0
    %215 = vmatprep.subr.mxu0 0.0
    %216 = vmatpush2.msra.mxu0 0.0
    %217 = vmatprep.subr.mxu0 0.0
    %218 = vmatpush2.msra.mxu0 0.0
    %219 = vmatprep.subr.mxu0 0.0
    %220 = vmatpush2.msra.mxu0 0.0
    %221 = vmatprep.subr.mxu0 0.0
    %222 = vmatpush2.msra.mxu0 0.0
    %223 = vmatprep.subr.mxu0 0.0
    %224 = vmatpush2.msra.mxu0 0.0
    %225 = vmatprep.subr.mxu0 0.0
    %226 = vmatpush2.msra.mxu0 0.0
    %227 = vmatprep.subr.mxu0 0.0
    %228 = vmatpush2.msra.mxu0 0.0
    %229 = vmatprep.subr.mxu0 0.0
    %230 = vmatpush2.msra.mxu0 0.0
    %231 = vmatprep.subr.mxu0 0.0
    %232 = vmatpush2.msra.mxu0 0.0
    %233 = vmatprep.subr.mxu0 0.0
    %234 = vmatpush2.msra.mxu0 0.0
    %235 = vmatprep.subr.mxu0 0.0
    %236 = vmatpush2.msra.mxu0 0.0
    %237 = vmatprep.subr.mxu0 0.0
    %238 = vmatpush2.msra.mxu0 0.0
    %239 = vmatprep.subr.mxu0 0.0
    %240 = vmatpush2.msra.mxu0 0.0
    %241 = vmatprep.subr.mxu0 0.0
    %242 = vmatpush2.msra.mxu0 0.0
    %243 = vmatprep.mubr.f32.mxu0 0.0
    %244 = vmatmul.mubr.f32.gmra.mxu0 %v177
    %v245 = vpop.f32.mrf.mxu0
    %v246 = vadd.f32 0.0, %v245
    %v247 = vpop.f32.mrf.mxu0
    %248 = vdwg.mxu0
    %v249 = vadd.f32 %v168, %v246
    %v250 = vxor.u32 %v249, 2147483648
    %v251 = vmul.f32 %v250, 1.442695
    %v252 = vpow.pop %v251
    %v253 = vadd.f32 %v252, 1.0
    %v254 = vrcp.pop %v253
    %v255 = vmul.f32 1.0, %v254
    %v256 = vtanh.pop %v249
    %v257 = vmul.f32 %v255, 0.0
    %259 = vrot.lane.b32.xlu0 %v256, 64
    %v260 = vpop.permute.xlu0 %259
    %v262 = vmul.f32 %v255, %v260
    %264 = vrot.lane.b32.xlu0 %v262, 32
    %v265 = vpop.permute.xlu0 %264
    %v267 = vadd.f32 %v257, %v265
    %v268 = vtanh.pop %v267
    %270 = vrot.lane.b32.xlu0 %v268, 64
    %v271 = vpop.permute.xlu0 %270
    %v273 = vmul.f32 %v255, %v271
    %275 = vrot.lane.b32.xlu0 %v273, 32
    %v276 = vpop.permute.xlu0 %275
    %v277 = vsel %vm175, %v276, 0
    %279 = vmatprep.subr.mxu0 0.0
    %280 = vmatpush1.msra.mxu0 0.0
    %281 = vmatprep.subr.mxu0 0.0
    %282 = vmatpush1.msra.mxu0 0.0
    %283 = vmatprep.subr.mxu0 0.0
    %284 = vmatpush1.msra.mxu0 0.0
    %285 = vmatprep.subr.mxu0 0.0
    %286 = vmatpush1.msra.mxu0 0.0
    %287 = vmatprep.subr.mxu0 0.0
    %288 = vmatpush1.msra.mxu0 0.0
    %289 = vmatprep.subr.mxu0 0.0
    %290 = vmatpush1.msra.mxu0 0.0
    %291 = vmatprep.subr.mxu0 0.0
    %292 = vmatpush1.msra.mxu0 0.0
    %293 = vmatprep.subr.mxu0 0.0
    %294 = vmatpush1.msra.mxu0 0.0
    %295 = vmatprep.subr.mxu0 0.0
    %296 = vmatpush1.msra.mxu0 0.0
    %297 = vmatprep.subr.mxu0 0.0
    %298 = vmatpush1.msra.mxu0 0.0
    %299 = vmatprep.subr.mxu0 0.0
    %300 = vmatpush1.msra.mxu0 0.0
    %301 = vmatprep.subr.mxu0 0.0
    %302 = vmatpush1.msra.mxu0 0.0
    %303 = vmatprep.subr.mxu0 0.0
    %304 = vmatpush1.msra.mxu0 %v174
    %305 = vmatprep.subr.mxu0 0.0
    %306 = vmatpush1.msra.mxu0 %v173
    %307 = vmatprep.subr.mxu0 0.0
    %308 = vmatpush1.msra.mxu0 %v172
    %309 = vmatprep.subr.mxu0 0.0
    %310 = vmatpush1.msra.mxu0 %v171
    %311 = vmatprep.subr.mxu0 0.0
    %312 = vmatpush2.msra.mxu0 0.0
    %313 = vmatprep.subr.mxu0 0.0
    %314 = vmatpush2.msra.mxu0 0.0
    %315 = vmatprep.subr.mxu0 0.0
    %316 = vmatpush2.msra.mxu0 0.0
    %317 = vmatprep.subr.mxu0 0.0
    %318 = vmatpush2.msra.mxu0 0.0
    %319 = vmatprep.subr.mxu0 0.0
    %320 = vmatpush2.msra.mxu0 0.0
    %321 = vmatprep.subr.mxu0 0.0
    %322 = vmatpush2.msra.mxu0 0.0
    %323 = vmatprep.subr.mxu0 0.0
    %324 = vmatpush2.msra.mxu0 0.0
    %325 = vmatprep.subr.mxu0 0.0
    %326 = vmatpush2.msra.mxu0 0.0
    %327 = vmatprep.subr.mxu0 0.0
    %328 = vmatpush2.msra.mxu0 0.0
    %329 = vmatprep.subr.mxu0 0.0
    %330 = vmatpush2.msra.mxu0 0.0
    %331 = vmatprep.subr.mxu0 0.0
    %332 = vmatpush2.msra.mxu0 0.0
    %333 = vmatprep.subr.mxu0 0.0
    %334 = vmatpush2.msra.mxu0 0.0
    %335 = vmatprep.subr.mxu0 0.0
    %336 = vmatpush2.msra.mxu0 0.0
    %337 = vmatprep.subr.mxu0 0.0
    %338 = vmatpush2.msra.mxu0 0.0
    %339 = vmatprep.subr.mxu0 0.0
    %340 = vmatpush2.msra.mxu0 0.0
    %341 = vmatprep.subr.mxu0 0.0
    %342 = vmatpush2.msra.mxu0 0.0
    %343 = vmatprep.mubr.f32.mxu0 0.0
    %344 = vmatmul.mubr.f32.gmra.mxu0 %v277
    %v345 = vpop.f32.mrf.mxu0
    %v346 = vadd.f32 0.0, %v345
    %v347 = vpop.f32.mrf.mxu0
    %348 = vdwg.mxu0
    %v350 = vrot.slane %v346, 7
    %v352 = vadd.f32 %v168, %v350
    %v353 = vxor.u32 %v352, 2147483648
    %v354 = vmul.f32 %v353, 1.442695
    %v355 = vpow.pop %v354
    %v356 = vadd.f32 %v355, 1.0
    %v357 = vrcp.pop %v356
    %v358 = vmul.f32 1.0, %v357
    %v359 = vtanh.pop %v352
    %v361 = vrot.slane %v267, 7
    %v363 = vmul.f32 %v358, %v361
    %365 = vrot.lane.b32.xlu0 %v359, 64
    %v366 = vpop.permute.xlu0 %365
    %v368 = vmul.f32 %v358, %v366
    %370 = vrot.lane.b32.xlu0 %v368, 32
    %v371 = vpop.permute.xlu0 %370
    %v373 = vadd.f32 %v363, %v371
    %v374 = vtanh.pop %v373
    %376 = vrot.lane.b32.xlu0 %v374, 64
    %v377 = vpop.permute.xlu0 %376
    %v379 = vmul.f32 %v358, %v377
    %v381 = vrot.slane %v379, 1
    %382 = vrot.lane.b32.xlu0 %v381, 32
    %v383 = vpop.permute.xlu0 %382
    %v384 = vsel %vm175, %v383, 0
    %386 = vmatprep.subr.mxu0 0.0
    %387 = vmatpush1.msra.mxu0 0.0
    %388 = vmatprep.subr.mxu0 0.0
    %389 = vmatpush1.msra.mxu0 0.0
    %390 = vmatprep.subr.mxu0 0.0
    %391 = vmatpush1.msra.mxu0 0.0
    %392 = vmatprep.subr.mxu0 0.0
    %393 = vmatpush1.msra.mxu0 0.0
    %394 = vmatprep.subr.mxu0 0.0
    %395 = vmatpush1.msra.mxu0 0.0
    %396 = vmatprep.subr.mxu0 0.0
    %397 = vmatpush1.msra.mxu0 0.0
    %398 = vmatprep.subr.mxu0 0.0
    %399 = vmatpush1.msra.mxu0 0.0
    %400 = vmatprep.subr.mxu0 0.0
    %401 = vmatpush1.msra.mxu0 0.0
    %402 = vmatprep.subr.mxu0 0.0
    %403 = vmatpush1.msra.mxu0 0.0
    %404 = vmatprep.subr.mxu0 0.0
    %405 = vmatpush1.msra.mxu0 0.0
    %406 = vmatprep.subr.mxu0 0.0
    %407 = vmatpush1.msra.mxu0 0.0
    %408 = vmatprep.subr.mxu0 0.0
    %409 = vmatpush1.msra.mxu0 0.0
    %410 = vmatprep.subr.mxu0 0.0
    %411 = vmatpush1.msra.mxu0 %v174
    %412 = vmatprep.subr.mxu0 0.0
    %413 = vmatpush1.msra.mxu0 %v173
    %414 = vmatprep.subr.mxu0 0.0
    %415 = vmatpush1.msra.mxu0 %v172
    %416 = vmatprep.subr.mxu0 0.0
    %417 = vmatpush1.msra.mxu0 %v171
    %418 = vmatprep.subr.mxu0 0.0
    %419 = vmatpush2.msra.mxu0 0.0
    %420 = vmatprep.subr.mxu0 0.0
    %421 = vmatpush2.msra.mxu0 0.0
    %422 = vmatprep.subr.mxu0 0.0
    %423 = vmatpush2.msra.mxu0 0.0
    %424 = vmatprep.subr.mxu0 0.0
    %425 = vmatpush2.msra.mxu0 0.0
    %426 = vmatprep.subr.mxu0 0.0
    %427 = vmatpush2.msra.mxu0 0.0
    %428 = vmatprep.subr.mxu0 0.0
    %429 = vmatpush2.msra.mxu0 0.0
    %430 = vmatprep.subr.mxu0 0.0
    %431 = vmatpush2.msra.mxu0 0.0
    %432 = vmatprep.subr.mxu0 0.0
    %433 = vmatpush2.msra.mxu0 0.0
    %434 = vmatprep.subr.mxu0 0.0
    %435 = vmatpush2.msra.mxu0 0.0
    %436 = vmatprep.subr.mxu0 0.0
    %437 = vmatpush2.msra.mxu0 0.0
    %438 = vmatprep.subr.mxu0 0.0
    %439 = vmatpush2.msra.mxu0 0.0
    %440 = vmatprep.subr.mxu0 0.0
    %441 = vmatpush2.msra.mxu0 0.0
    %442 = vmatprep.subr.mxu0 0.0
    %443 = vmatpush2.msra.mxu0 0.0
    %444 = vmatprep.subr.mxu0 0.0
    %445 = vmatpush2.msra.mxu0 0.0
    %446 = vmatprep.subr.mxu0 0.0
    %447 = vmatpush2.msra.mxu0 0.0
    %448 = vmatprep.subr.mxu0 0.0
    %449 = vmatpush2.msra.mxu0 0.0
    %450 = vmatprep.mubr.f32.mxu0 0.0
    %451 = vmatmul.mubr.f32.gmra.mxu0 %v384
    %v452 = vpop.f32.mrf.mxu0
    %v453 = vadd.f32 0.0, %v452
    %v454 = vpop.f32.mrf.mxu0
    %455 = vdwg.mxu0
    %v457 = vrot.slane %v453, 6
    %v459 = vadd.f32 %v168, %v457
    %v460 = vxor.u32 %v459, 2147483648
    %v461 = vmul.f32 %v460, 1.442695
    %v462 = vpow.pop %v461
    %v463 = vadd.f32 %v462, 1.0
    %v464 = vrcp.pop %v463
    %v465 = vmul.f32 1.0, %v464
    %v466 = vtanh.pop %v459
    %v468 = vrot.slane %v373, 7
    %v470 = vmul.f32 %v465, %v468
    %472 = vrot.lane.b32.xlu0 %v466, 64
    %v473 = vpop.permute.xlu0 %472
    %v475 = vmul.f32 %v465, %v473
    %477 = vrot.lane.b32.xlu0 %v475, 32
    %v478 = vpop.permute.xlu0 %477
    %v480 = vadd.f32 %v470, %v478
    %v481 = vtanh.pop %v480
    %483 = vrot.lane.b32.xlu0 %v481, 64
    %v484 = vpop.permute.xlu0 %483
    %v486 = vmul.f32 %v465, %v484
    %v488 = vrot.slane %v486, 2
    %489 = vrot.lane.b32.xlu0 %v488, 32
    %v490 = vpop.permute.xlu0 %489
    %v491 = vsel %vm175, %v490, 0
    %493 = vmatprep.subr.mxu0 0.0
    %494 = vmatpush1.msra.mxu0 0.0
    %495 = vmatprep.subr.mxu0 0.0
    %496 = vmatpush1.msra.mxu0 0.0
    %497 = vmatprep.subr.mxu0 0.0
    %498 = vmatpush1.msra.mxu0 0.0
    %499 = vmatprep.subr.mxu0 0.0
    %500 = vmatpush1.msra.mxu0 0.0
    %501 = vmatprep.subr.mxu0 0.0
    %502 = vmatpush1.msra.mxu0 0.0
    %503 = vmatprep.subr.mxu0 0.0
    %504 = vmatpush1.msra.mxu0 0.0
    %505 = vmatprep.subr.mxu0 0.0
    %506 = vmatpush1.msra.mxu0 0.0
    %507 = vmatprep.subr.mxu0 0.0
    %508 = vmatpush1.msra.mxu0 0.0
    %509 = vmatprep.subr.mxu0 0.0
    %510 = vmatpush1.msra.mxu0 0.0
    %511 = vmatprep.subr.mxu0 0.0
    %512 = vmatpush1.msra.mxu0 0.0
    %513 = vmatprep.subr.mxu0 0.0
    %514 = vmatpush1.msra.mxu0 0.0
    %515 = vmatprep.subr.mxu0 0.0
    %516 = vmatpush1.msra.mxu0 0.0
    %517 = vmatprep.subr.mxu0 0.0
    %518 = vmatpush1.msra.mxu0 %v174
    %519 = vmatprep.subr.mxu0 0.0
    %520 = vmatpush1.msra.mxu0 %v173
    %521 = vmatprep.subr.mxu0 0.0
    %522 = vmatpush1.msra.mxu0 %v172
    %523 = vmatprep.subr.mxu0 0.0
    %524 = vmatpush1.msra.mxu0 %v171
    %525 = vmatprep.subr.mxu0 0.0
    %526 = vmatpush2.msra.mxu0 0.0
    %527 = vmatprep.subr.mxu0 0.0
    %528 = vmatpush2.msra.mxu0 0.0
    %529 = vmatprep.subr.mxu0 0.0
    %530 = vmatpush2.msra.mxu0 0.0
    %531 = vmatprep.subr.mxu0 0.0
    %532 = vmatpush2.msra.mxu0 0.0
    %533 = vmatprep.subr.mxu0 0.0
    %534 = vmatpush2.msra.mxu0 0.0
    %535 = vmatprep.subr.mxu0 0.0
    %536 = vmatpush2.msra.mxu0 0.0
    %537 = vmatprep.subr.mxu0 0.0
    %538 = vmatpush2.msra.mxu0 0.0
    %539 = vmatprep.subr.mxu0 0.0
    %540 = vmatpush2.msra.mxu0 0.0
    %541 = vmatprep.subr.mxu0 0.0
    %542 = vmatpush2.msra.mxu0 0.0
    %543 = vmatprep.subr.mxu0 0.0
    %544 = vmatpush2.msra.mxu0 0.0
    %545 = vmatprep.subr.mxu0 0.0
    %546 = vmatpush2.msra.mxu0 0.0
    %547 = vmatprep.subr.mxu0 0.0
    %548 = vmatpush2.msra.mxu0 0.0
    %549 = vmatprep.subr.mxu0 0.0
    %550 = vmatpush2.msra.mxu0 0.0
    %551 = vmatprep.subr.mxu0 0.0
    %552 = vmatpush2.msra.mxu0 0.0
    %553 = vmatprep.subr.mxu0 0.0
    %554 = vmatpush2.msra.mxu0 0.0
    %555 = vmatprep.subr.mxu0 0.0
    %556 = vmatpush2.msra.mxu0 0.0
    %557 = vmatprep.mubr.f32.mxu0 0.0
    %558 = vmatmul.mubr.f32.gmra.mxu0 %v491
    %v559 = vpop.f32.mrf.mxu0
    %v560 = vadd.f32 0.0, %v559
    %v561 = vpop.f32.mrf.mxu0
    %562 = vdwg.mxu0
    %v564 = vrot.slane %v560, 5
    %v566 = vadd.f32 %v168, %v564
    %v567 = vxor.u32 %v566, 2147483648
    %v568 = vmul.f32 %v567, 1.442695
    %v569 = vpow.pop %v568
    %v570 = vadd.f32 %v569, 1.0
    %v571 = vrcp.pop %v570
    %v572 = vmul.f32 1.0, %v571
    %v573 = vtanh.pop %v566
    %v575 = vrot.slane %v480, 7
    %v577 = vmul.f32 %v572, %v575
    %579 = vrot.lane.b32.xlu0 %v573, 64
    %v580 = vpop.permute.xlu0 %579
    %v582 = vmul.f32 %v572, %v580
    %584 = vrot.lane.b32.xlu0 %v582, 32
    %v585 = vpop.permute.xlu0 %584
    %v587 = vadd.f32 %v577, %v585
    %v588 = vtanh.pop %v587
    %590 = vrot.lane.b32.xlu0 %v588, 64
    %v591 = vpop.permute.xlu0 %590
    %v593 = vmul.f32 %v572, %v591
    %v595 = vrot.slane %v593, 3
    %596 = vrot.lane.b32.xlu0 %v595, 32
    %v597 = vpop.permute.xlu0 %596
    %v598 = vsel %vm175, %v597, 0
    %600 = vmatprep.subr.mxu0 0.0
    %601 = vmatpush1.msra.mxu0 0.0
    %602 = vmatprep.subr.mxu0 0.0
    %603 = vmatpush1.msra.mxu0 0.0
    %604 = vmatprep.subr.mxu0 0.0
    %605 = vmatpush1.msra.mxu0 0.0
    %606 = vmatprep.subr.mxu0 0.0
    %607 = vmatpush1.msra.mxu0 0.0
    %608 = vmatprep.subr.mxu0 0.0
    %609 = vmatpush1.msra.mxu0 0.0
    %610 = vmatprep.subr.mxu0 0.0
    %611 = vmatpush1.msra.mxu0 0.0
    %612 = vmatprep.subr.mxu0 0.0
    %613 = vmatpush1.msra.mxu0 0.0
    %614 = vmatprep.subr.mxu0 0.0
    %615 = vmatpush1.msra.mxu0 0.0
    %616 = vmatprep.subr.mxu0 0.0
    %617 = vmatpush1.msra.mxu0 0.0
    %618 = vmatprep.subr.mxu0 0.0
    %619 = vmatpush1.msra.mxu0 0.0
    %620 = vmatprep.subr.mxu0 0.0
    %621 = vmatpush1.msra.mxu0 0.0
    %622 = vmatprep.subr.mxu0 0.0
    %623 = vmatpush1.msra.mxu0 0.0
    %624 = vmatprep.subr.mxu0 0.0
    %625 = vmatpush1.msra.mxu0 %v174
    %626 = vmatprep.subr.mxu0 0.0
    %627 = vmatpush1.msra.mxu0 %v173
    %628 = vmatprep.subr.mxu0 0.0
    %629 = vmatpush1.msra.mxu0 %v172
    %630 = vmatprep.subr.mxu0 0.0
    %631 = vmatpush1.msra.mxu0 %v171
    %632 = vmatprep.subr.mxu0 0.0
    %633 = vmatpush2.msra.mxu0 0.0
    %634 = vmatprep.subr.mxu0 0.0
    %635 = vmatpush2.msra.mxu0 0.0
    %636 = vmatprep.subr.mxu0 0.0
    %637 = vmatpush2.msra.mxu0 0.0
    %638 = vmatprep.subr.mxu0 0.0
    %639 = vmatpush2.msra.mxu0 0.0
    %640 = vmatprep.subr.mxu0 0.0
    %641 = vmatpush2.msra.mxu0 0.0
    %642 = vmatprep.subr.mxu0 0.0
    %643 = vmatpush2.msra.mxu0 0.0
    %644 = vmatprep.subr.mxu0 0.0
    %645 = vmatpush2.msra.mxu0 0.0
    %646 = vmatprep.subr.mxu0 0.0
    %647 = vmatpush2.msra.mxu0 0.0
    %648 = vmatprep.subr.mxu0 0.0
    %649 = vmatpush2.msra.mxu0 0.0
    %650 = vmatprep.subr.mxu0 0.0
    %651 = vmatpush2.msra.mxu0 0.0
    %652 = vmatprep.subr.mxu0 0.0
    %653 = vmatpush2.msra.mxu0 0.0
    %654 = vmatprep.subr.mxu0 0.0
    %655 = vmatpush2.msra.mxu0 0.0
    %656 = vmatprep.subr.mxu0 0.0
    %657 = vmatpush2.msra.mxu0 0.0
    %658 = vmatprep.subr.mxu0 0.0
    %659 = vmatpush2.msra.mxu0 0.0
    %660 = vmatprep.subr.mxu0 0.0
    %661 = vmatpush2.msra.mxu0 0.0
    %662 = vmatprep.subr.mxu0 0.0
    %663 = vmatpush2.msra.mxu0 0.0
    %664 = vmatprep.mubr.f32.mxu0 0.0
    %665 = vmatmul.mubr.f32.gmra.mxu0 %v598
    %v666 = vpop.f32.mrf.mxu0
    %v667 = vadd.f32 0.0, %v666
    %v668 = vpop.f32.mrf.mxu0
    %669 = vdwg.mxu0
    %v671 = vrot.slane %v667, 4
    %v673 = vadd.f32 %v168, %v671
    %v674 = vxor.u32 %v673, 2147483648
    %v675 = vmul.f32 %v674, 1.442695
    %v676 = vpow.pop %v675
    %v677 = vadd.f32 %v676, 1.0
    %v678 = vrcp.pop %v677
    %v679 = vmul.f32 1.0, %v678
    %v680 = vtanh.pop %v673
    %v682 = vrot.slane %v587, 7
    %v684 = vmul.f32 %v679, %v682
    %686 = vrot.lane.b32.xlu0 %v680, 64
    %v687 = vpop.permute.xlu0 %686
    %v689 = vmul.f32 %v679, %v687
    %691 = vrot.lane.b32.xlu0 %v689, 32
    %v692 = vpop.permute.xlu0 %691
    %v694 = vadd.f32 %v684, %v692
    %v695 = vtanh.pop %v694
    %697 = vrot.lane.b32.xlu0 %v695, 64
    %v698 = vpop.permute.xlu0 %697
    %v700 = vmul.f32 %v679, %v698
    %v702 = vrot.slane %v700, 4
    %703 = vrot.lane.b32.xlu0 %v702, 32
    %v704 = vpop.permute.xlu0 %703
    %v705 = vsel %vm175, %v704, 0
    %707 = vmatprep.subr.mxu0 0.0
    %708 = vmatpush1.msra.mxu0 0.0
    %709 = vmatprep.subr.mxu0 0.0
    %710 = vmatpush1.msra.mxu0 0.0
    %711 = vmatprep.subr.mxu0 0.0
    %712 = vmatpush1.msra.mxu0 0.0
    %713 = vmatprep.subr.mxu0 0.0
    %714 = vmatpush1.msra.mxu0 0.0
    %715 = vmatprep.subr.mxu0 0.0
    %716 = vmatpush1.msra.mxu0 0.0
    %717 = vmatprep.subr.mxu0 0.0
    %718 = vmatpush1.msra.mxu0 0.0
    %719 = vmatprep.subr.mxu0 0.0
    %720 = vmatpush1.msra.mxu0 0.0
    %721 = vmatprep.subr.mxu0 0.0
    %722 = vmatpush1.msra.mxu0 0.0
    %723 = vmatprep.subr.mxu0 0.0
    %724 = vmatpush1.msra.mxu0 0.0
    %725 = vmatprep.subr.mxu0 0.0
    %726 = vmatpush1.msra.mxu0 0.0
    %727 = vmatprep.subr.mxu0 0.0
    %728 = vmatpush1.msra.mxu0 0.0
    %729 = vmatprep.subr.mxu0 0.0
    %730 = vmatpush1.msra.mxu0 0.0
    %731 = vmatprep.subr.mxu0 0.0
    %732 = vmatpush1.msra.mxu0 %v174
    %733 = vmatprep.subr.mxu0 0.0
    %734 = vmatpush1.msra.mxu0 %v173
    %735 = vmatprep.subr.mxu0 0.0
    %736 = vmatpush1.msra.mxu0 %v172
    %737 = vmatprep.subr.mxu0 0.0
    %738 = vmatpush1.msra.mxu0 %v171
    %739 = vmatprep.subr.mxu0 0.0
    %740 = vmatpush2.msra.mxu0 0.0
    %741 = vmatprep.subr.mxu0 0.0
    %742 = vmatpush2.msra.mxu0 0.0
    %743 = vmatprep.subr.mxu0 0.0
    %744 = vmatpush2.msra.mxu0 0.0
    %745 = vmatprep.subr.mxu0 0.0
    %746 = vmatpush2.msra.mxu0 0.0
    %747 = vmatprep.subr.mxu0 0.0
    %748 = vmatpush2.msra.mxu0 0.0
    %749 = vmatprep.subr.mxu0 0.0
    %750 = vmatpush2.msra.mxu0 0.0
    %751 = vmatprep.subr.mxu0 0.0
    %752 = vmatpush2.msra.mxu0 0.0
    %753 = vmatprep.subr.mxu0 0.0
    %754 = vmatpush2.msra.mxu0 0.0
    %755 = vmatprep.subr.mxu0 0.0
    %756 = vmatpush2.msra.mxu0 0.0
    %757 = vmatprep.subr.mxu0 0.0
    %758 = vmatpush2.msra.mxu0 0.0
    %759 = vmatprep.subr.mxu0 0.0
    %760 = vmatpush2.msra.mxu0 0.0
    %761 = vmatprep.subr.mxu0 0.0
    %762 = vmatpush2.msra.mxu0 0.0
    %763 = vmatprep.subr.mxu0 0.0
    %764 = vmatpush2.msra.mxu0 0.0
    %765 = vmatprep.subr.mxu0 0.0
    %766 = vmatpush2.msra.mxu0 0.0
    %767 = vmatprep.subr.mxu0 0.0
    %768 = vmatpush2.msra.mxu0 0.0
    %769 = vmatprep.subr.mxu0 0.0
    %770 = vmatpush2.msra.mxu0 0.0
    %771 = vmatprep.mubr.f32.mxu0 0.0
    %772 = vmatmul.mubr.f32.gmra.mxu0 %v705
    %v773 = vpop.f32.mrf.mxu0
    %v774 = vadd.f32 0.0, %v773
    %v775 = vpop.f32.mrf.mxu0
    %776 = vdwg.mxu0
    %v778 = vrot.slane %v774, 3
    %v780 = vadd.f32 %v168, %v778
    %v781 = vxor.u32 %v780, 2147483648
    %v782 = vmul.f32 %v781, 1.442695
    %v783 = vpow.pop %v782
    %v784 = vadd.f32 %v783, 1.0
    %v785 = vrcp.pop %v784
    %v786 = vmul.f32 1.0, %v785
    %v787 = vtanh.pop %v780
    %v789 = vrot.slane %v694, 7
    %v791 = vmul.f32 %v786, %v789
    %793 = vrot.lane.b32.xlu0 %v787, 64
    %v794 = vpop.permute.xlu0 %793
    %v796 = vmul.f32 %v786, %v794
    %798 = vrot.lane.b32.xlu0 %v796, 32
    %v799 = vpop.permute.xlu0 %798
    %v801 = vadd.f32 %v791, %v799
    %v802 = vtanh.pop %v801
    %804 = vrot.lane.b32.xlu0 %v802, 64
    %v805 = vpop.permute.xlu0 %804
    %v807 = vmul.f32 %v786, %v805
    %v809 = vrot.slane %v807, 5
    %810 = vrot.lane.b32.xlu0 %v809, 32
    %v811 = vpop.permute.xlu0 %810
    %v812 = vsel %vm175, %v811, 0
    %814 = vmatprep.subr.mxu0 0.0
    %815 = vmatpush1.msra.mxu0 0.0
    %816 = vmatprep.subr.mxu0 0.0
    %817 = vmatpush1.msra.mxu0 0.0
    %818 = vmatprep.subr.mxu0 0.0
    %819 = vmatpush1.msra.mxu0 0.0
    %820 = vmatprep.subr.mxu0 0.0
    %821 = vmatpush1.msra.mxu0 0.0
    %822 = vmatprep.subr.mxu0 0.0
    %823 = vmatpush1.msra.mxu0 0.0
    %824 = vmatprep.subr.mxu0 0.0
    %825 = vmatpush1.msra.mxu0 0.0
    %826 = vmatprep.subr.mxu0 0.0
    %827 = vmatpush1.msra.mxu0 0.0
    %828 = vmatprep.subr.mxu0 0.0
    %829 = vmatpush1.msra.mxu0 0.0
    %830 = vmatprep.subr.mxu0 0.0
    %831 = vmatpush1.msra.mxu0 0.0
    %832 = vmatprep.subr.mxu0 0.0
    %833 = vmatpush1.msra.mxu0 0.0
    %834 = vmatprep.subr.mxu0 0.0
    %835 = vmatpush1.msra.mxu0 0.0
    %836 = vmatprep.subr.mxu0 0.0
    %837 = vmatpush1.msra.mxu0 0.0
    %838 = vmatprep.subr.mxu0 0.0
    %839 = vmatpush1.msra.mxu0 %v174
    %840 = vmatprep.subr.mxu0 0.0
    %841 = vmatpush1.msra.mxu0 %v173
    %842 = vmatprep.subr.mxu0 0.0
    %843 = vmatpush1.msra.mxu0 %v172
    %844 = vmatprep.subr.mxu0 0.0
    %845 = vmatpush1.msra.mxu0 %v171
    %846 = vmatprep.subr.mxu0 0.0
    %847 = vmatpush2.msra.mxu0 0.0
    %848 = vmatprep.subr.mxu0 0.0
    %849 = vmatpush2.msra.mxu0 0.0
    %850 = vmatprep.subr.mxu0 0.0
    %851 = vmatpush2.msra.mxu0 0.0
    %852 = vmatprep.subr.mxu0 0.0
    %853 = vmatpush2.msra.mxu0 0.0
    %854 = vmatprep.subr.mxu0 0.0
    %855 = vmatpush2.msra.mxu0 0.0
    %856 = vmatprep.subr.mxu0 0.0
    %857 = vmatpush2.msra.mxu0 0.0
    %858 = vmatprep.subr.mxu0 0.0
    %859 = vmatpush2.msra.mxu0 0.0
    %860 = vmatprep.subr.mxu0 0.0
    %861 = vmatpush2.msra.mxu0 0.0
    %862 = vmatprep.subr.mxu0 0.0
    %863 = vmatpush2.msra.mxu0 0.0
    %864 = vmatprep.subr.mxu0 0.0
    %865 = vmatpush2.msra.mxu0 0.0
    %866 = vmatprep.subr.mxu0 0.0
    %867 = vmatpush2.msra.mxu0 0.0
    %868 = vmatprep.subr.mxu0 0.0
    %869 = vmatpush2.msra.mxu0 0.0
    %870 = vmatprep.subr.mxu0 0.0
    %871 = vmatpush2.msra.mxu0 0.0
    %872 = vmatprep.subr.mxu0 0.0
    %873 = vmatpush2.msra.mxu0 0.0
    %874 = vmatprep.subr.mxu0 0.0
    %875 = vmatpush2.msra.mxu0 0.0
    %876 = vmatprep.subr.mxu0 0.0
    %877 = vmatpush2.msra.mxu0 0.0
    %878 = vmatprep.mubr.f32.mxu0 0.0
    %879 = vmatmul.mubr.f32.gmra.mxu0 %v812
    %v880 = vpop.f32.mrf.mxu0
    %v881 = vadd.f32 0.0, %v880
    %v882 = vpop.f32.mrf.mxu0
    %883 = vdwg.mxu0
    %v885 = vrot.slane %v881, 2
    %v887 = vadd.f32 %v168, %v885
    %v888 = vxor.u32 %v887, 2147483648
    %v889 = vmul.f32 %v888, 1.442695
    %v890 = vpow.pop %v889
    %v891 = vadd.f32 %v890, 1.0
    %v892 = vrcp.pop %v891
    %v893 = vmul.f32 1.0, %v892
    %v894 = vtanh.pop %v887
    %v896 = vrot.slane %v801, 7
    %v898 = vmul.f32 %v893, %v896
    %900 = vrot.lane.b32.xlu0 %v894, 64
    %v901 = vpop.permute.xlu0 %900
    %v903 = vmul.f32 %v893, %v901
    %905 = vrot.lane.b32.xlu0 %v903, 32
    %v906 = vpop.permute.xlu0 %905
    %v908 = vadd.f32 %v898, %v906
    %v909 = vtanh.pop %v908
    %911 = vrot.lane.b32.xlu0 %v909, 64
    %v912 = vpop.permute.xlu0 %911
    %v914 = vmul.f32 %v893, %v912
    %v916 = vrot.slane %v914, 6
    %917 = vrot.lane.b32.xlu0 %v916, 32
    %v918 = vpop.permute.xlu0 %917
    %v919 = vsel %vm175, %v918, 0
    %921 = vmatprep.subr.mxu0 0.0
    %922 = vmatpush1.msra.mxu0 0.0
    %923 = vmatprep.subr.mxu0 0.0
    %924 = vmatpush1.msra.mxu0 0.0
    %925 = vmatprep.subr.mxu0 0.0
    %926 = vmatpush1.msra.mxu0 0.0
    %927 = vmatprep.subr.mxu0 0.0
    %928 = vmatpush1.msra.mxu0 0.0
    %929 = vmatprep.subr.mxu0 0.0
    %930 = vmatpush1.msra.mxu0 0.0
    %931 = vmatprep.subr.mxu0 0.0
    %932 = vmatpush1.msra.mxu0 0.0
    %933 = vmatprep.subr.mxu0 0.0
    %934 = vmatpush1.msra.mxu0 0.0
    %935 = vmatprep.subr.mxu0 0.0
    %936 = vmatpush1.msra.mxu0 0.0
    %937 = vmatprep.subr.mxu0 0.0
    %938 = vmatpush1.msra.mxu0 0.0
    %939 = vmatprep.subr.mxu0 0.0
    %940 = vmatpush1.msra.mxu0 0.0
    %941 = vmatprep.subr.mxu0 0.0
    %942 = vmatpush1.msra.mxu0 0.0
    %943 = vmatprep.subr.mxu0 0.0
    %944 = vmatpush1.msra.mxu0 0.0
    %945 = vmatprep.subr.mxu0 0.0
    %946 = vmatpush1.msra.mxu0 %v174
    %947 = vmatprep.subr.mxu0 0.0
    %948 = vmatpush1.msra.mxu0 %v173
    %949 = vmatprep.subr.mxu0 0.0
    %950 = vmatpush1.msra.mxu0 %v172
    %951 = vmatprep.subr.mxu0 0.0
    %952 = vmatpush1.msra.mxu0 %v171
    %953 = vmatprep.subr.mxu0 0.0
    %954 = vmatpush2.msra.mxu0 0.0
    %955 = vmatprep.subr.mxu0 0.0
    %956 = vmatpush2.msra.mxu0 0.0
    %957 = vmatprep.subr.mxu0 0.0
    %958 = vmatpush2.msra.mxu0 0.0
    %959 = vmatprep.subr.mxu0 0.0
    %960 = vmatpush2.msra.mxu0 0.0
    %961 = vmatprep.subr.mxu0 0.0
    %962 = vmatpush2.msra.mxu0 0.0
    %963 = vmatprep.subr.mxu0 0.0
    %964 = vmatpush2.msra.mxu0 0.0
    %965 = vmatprep.subr.mxu0 0.0
    %966 = vmatpush2.msra.mxu0 0.0
    %967 = vmatprep.subr.mxu0 0.0
    %968 = vmatpush2.msra.mxu0 0.0
    %969 = vmatprep.subr.mxu0 0.0
    %970 = vmatpush2.msra.mxu0 0.0
    %971 = vmatprep.subr.mxu0 0.0
    %972 = vmatpush2.msra.mxu0 0.0
    %973 = vmatprep.subr.mxu0 0.0
    %974 = vmatpush2.msra.mxu0 0.0
    %975 = vmatprep.subr.mxu0 0.0
    %976 = vmatpush2.msra.mxu0 0.0
    %977 = vmatprep.subr.mxu0 0.0
    %978 = vmatpush2.msra.mxu0 0.0
    %979 = vmatprep.subr.mxu0 0.0
    %980 = vmatpush2.msra.mxu0 0.0
    %981 = vmatprep.subr.mxu0 0.0
    %982 = vmatpush2.msra.mxu0 0.0
    %983 = vmatprep.subr.mxu0 0.0
    %984 = vmatpush2.msra.mxu0 0.0
    %985 = vmatprep.mubr.f32.mxu0 0.0
    %986 = vmatmul.mubr.f32.gmra.mxu0 %v919
    %v987 = vpop.f32.mrf.mxu0
    %v988 = vadd.f32 0.0, %v987
    %v989 = vpop.f32.mrf.mxu0
    %990 = vdwg.mxu0
    %v992 = vrot.slane %v988, 1
    %v994 = vadd.f32 %v168, %v992
    %v995 = vxor.u32 %v994, 2147483648
    %v996 = vmul.f32 %v995, 1.442695
    %v997 = vpow.pop %v996
    %v998 = vadd.f32 %v997, 1.0
    %v999 = vrcp.pop %v998
    %v1000 = vmul.f32 1.0, %v999
    %v1001 = vtanh.pop %v994
    %v1003 = vrot.slane %v908, 7
    %v1005 = vmul.f32 %v1000, %v1003
    %1007 = vrot.lane.b32.xlu0 %v1001, 64
    %v1008 = vpop.permute.xlu0 %1007
    %v1010 = vmul.f32 %v1000, %v1008
    %1012 = vrot.lane.b32.xlu0 %v1010, 32
    %v1013 = vpop.permute.xlu0 %1012
    %v1015 = vadd.f32 %v1005, %v1013
    %v1016 = vtanh.pop %v1015
    %1018 = vrot.lane.b32.xlu0 %v1016, 64
    %v1019 = vpop.permute.xlu0 %1018
    %v1021 = vmul.f32 %v1000, %v1019
    %v1022 = vld [vmem:[#allocation8] sm:$0xff]
    %v1023 = vld [vmem:[#allocation8 + $0x8] sm:$0xff]
    %v1024 = vld [vmem:[#allocation8 + $0x10] sm:$0xff]
    %v1025 = vld [vmem:[#allocation8 + $0x18] sm:$0xff]
    %v1026 = vld [vmem:[%s5] sm:$0x1]
    %v1028 = vrot.slane %v1021, 7
    %1029 = vrot.lane.b32.xlu0 %v1028, 32
    %v1030 = vpop.permute.xlu0 %1029
    %v1031 = vsel %vm175, %v1030, 0
    %1033 = vmatprep.subr.mxu0 0.0
    %1034 = vmatpush1.msra.mxu0 0.0
    %1035 = vmatprep.subr.mxu0 0.0
    %1036 = vmatpush1.msra.mxu0 0.0
    %1037 = vmatprep.subr.mxu0 0.0
    %1038 = vmatpush1.msra.mxu0 0.0
    %1039 = vmatprep.subr.mxu0 0.0
    %1040 = vmatpush1.msra.mxu0 0.0
    %1041 = vmatprep.subr.mxu0 0.0
    %1042 = vmatpush1.msra.mxu0 0.0
    %1043 = vmatprep.subr.mxu0 0.0
    %1044 = vmatpush1.msra.mxu0 0.0
    %1045 = vmatprep.subr.mxu0 0.0
    %1046 = vmatpush1.msra.mxu0 0.0
    %1047 = vmatprep.subr.mxu0 0.0
    %1048 = vmatpush1.msra.mxu0 0.0
    %1049 = vmatprep.subr.mxu0 0.0
    %1050 = vmatpush1.msra.mxu0 0.0
    %1051 = vmatprep.subr.mxu0 0.0
    %1052 = vmatpush1.msra.mxu0 0.0
    %1053 = vmatprep.subr.mxu0 0.0
    %1054 = vmatpush1.msra.mxu0 0.0
    %1055 = vmatprep.subr.mxu0 0.0
    %1056 = vmatpush1.msra.mxu0 0.0
    %1057 = vmatprep.subr.mxu0 0.0
    %1058 = vmatpush1.msra.mxu0 %v1025
    %1059 = vmatprep.subr.mxu0 0.0
    %1060 = vmatpush1.msra.mxu0 %v1024
    %1061 = vmatprep.subr.mxu0 0.0
    %1062 = vmatpush1.msra.mxu0 %v1023
    %1063 = vmatprep.subr.mxu0 0.0
    %1064 = vmatpush1.msra.mxu0 %v1022
    %1065 = vmatprep.subr.mxu0 0.0
    %1066 = vmatpush2.msra.mxu0 0.0
    %1067 = vmatprep.subr.mxu0 0.0
    %1068 = vmatpush2.msra.mxu0 0.0
    %1069 = vmatprep.subr.mxu0 0.0
    %1070 = vmatpush2.msra.mxu0 0.0
    %1071 = vmatprep.subr.mxu0 0.0
    %1072 = vmatpush2.msra.mxu0 0.0
    %1073 = vmatprep.subr.mxu0 0.0
    %1074 = vmatpush2.msra.mxu0 0.0
    %1075 = vmatprep.subr.mxu0 0.0
    %1076 = vmatpush2.msra.mxu0 0.0
    %1077 = vmatprep.subr.mxu0 0.0
    %1078 = vmatpush2.msra.mxu0 0.0
    %1079 = vmatprep.subr.mxu0 0.0
    %1080 = vmatpush2.msra.mxu0 0.0
    %1081 = vmatprep.subr.mxu0 0.0
    %1082 = vmatpush2.msra.mxu0 0.0
    %1083 = vmatprep.subr.mxu0 0.0
    %1084 = vmatpush2.msra.mxu0 0.0
    %1085 = vmatprep.subr.mxu0 0.0
    %1086 = vmatpush2.msra.mxu0 0.0
    %1087 = vmatprep.subr.mxu0 0.0
    %1088 = vmatpush2.msra.mxu0 0.0
    %1089 = vmatprep.subr.mxu0 0.0
    %1090 = vmatpush2.msra.mxu0 0.0
    %1091 = vmatprep.subr.mxu0 0.0
    %1092 = vmatpush2.msra.mxu0 0.0
    %1093 = vmatprep.subr.mxu0 0.0
    %1094 = vmatpush2.msra.mxu0 0.0
    %1095 = vmatprep.subr.mxu0 0.0
    %1096 = vmatpush2.msra.mxu0 0.0
    %1097 = vmatprep.mubr.f32.mxu0 0.0
    %1098 = vmatmul.mubr.f32.gmra.mxu0 %v1031
    %v1099 = vpop.f32.mrf.mxu0
    %v1100 = vadd.f32 %v1026, %v1099
    %v1101 = vpop.f32.mrf.mxu0
    %1102 = vdwg.mxu0
    %1103 = vst [vmem:[#allocation10] sm:$0x1] %v1100
    // Predicated region
    $region42: #{tpu_custom_call.1} parent=1 // pred_check
      _
    $region43: #{tpu_custom_call.1} parent=1 // pred_check_branch
      %1105 = sbr.rel (0) target = $region45
    $region44: #{tpu_custom_call.1} parent=1 // pred_region
      %s1107 = ssub.s32 16, 16
      %1108 = vsyncadd [#allocation4], %s1107
      %s1110 = sshll.u32 [#allocation10], 4
      %s1111 = int_to_ptr.vmem [resolvable:$true] %s1110
      %1113 = dma.vmem_to_hbm [thread:$0]  %s1111, 16, %s6, [#allocation4]
    $region45: #{tpu_custom_call.1} parent=1 // pred_fallthru
      _
    // Predicated region
    $region46: #{tpu_custom_call.1} parent=1 // pred_check
      _
    $region47: #{tpu_custom_call.1} parent=1 // pred_check_branch
      %1115 = sbr.rel (0) target = $region49
    $region48: #{tpu_custom_call.1} parent=1 // pred_region
      %1116 = dma.done [#allocation4], 16
    $region49: #{tpu_custom_call.1} parent=1 // pred_fallthru
      _
    %1117 = vsyncpa [#allocation3], 1
    %1118 = vsyncpa [#allocation6], 1
    %1119 = vsyncpa [#allocation9], 1
    %1120 = vsyncpa [#allocation4], 1

</llo_original>
